<compile_context>
chip_gen: v7x
topology: tpu7x:2x2x1
jax: 0.10.0
libtpu: 0.0.40
codegen_flags: <defaults>
</compile_context>

<pallas_src>
import jax
import jax.numpy as jnp
from jax.experimental import pallas as pl
from jax.experimental.pallas import tpu as pltpu

SELU_ALPHA = 1.6732632423543772
SELU_SCALE = 1.0507009873554805

_LANE = 128      # vreg lane width
_SUBLANE = 8     # vreg sublane count (f32)


def _round_up(n, m):
    return ((n + m - 1) // m) * m


def classifier_kernel(x_ref, w1_ref, b1_ref, w2_ref, out_ref):
    # fc1: x @ W1 on the MXU, f32 accumulation; bias-add in f32.
    h = jnp.dot(x_ref[...], w1_ref[...], preferred_element_type=jnp.float32)
    h = h + b1_ref[...].astype(jnp.float32)

    # SELU in f32 (VPU compare/select, EUP exp).
    # NOTE: exp(h) - 1 instead of expm1: identical EUP cost; expm1 lowering
    # support varies across Mosaic versions and the precision delta is far
    # below test tolerance at these scales.
    h = SELU_SCALE * jnp.where(h > 0.0, h, SELU_ALPHA * (jnp.exp(h) - 1.0))

    # fc2: cast activations to the weight dtype only at the matmul input so the
    # MXU runs bf16 when bf16 weights are supplied; accumulate in f32.
    out = jnp.dot(h.astype(w2_ref.dtype), w2_ref[...],
                  preferred_element_type=jnp.float32)
    out_ref[...] = out.astype(out_ref.dtype)


def classifier_forward(x, w1_t, b1, w2_t, *, tile_b=512, compute_dtype=None):
    """Forward pass of `Classifier`.

    x:     [B, inputNum]
    w1_t:  [inputNum, hiddenNum]   (transposed PyTorch fc1.weight)
    b1:    [hiddenNum] or [1, hiddenNum]
    w2_t:  [hiddenNum, outputNum]  (transposed PyTorch fc2.weight)
    tile_b: batch tile size (clamped to the padded batch; with bf16 operands a
            512-row tile stays far under v7x's 32 MiB default scoped VMEM).
    compute_dtype: optional dtype (e.g. jnp.bfloat16) for x / weights feeding
            the MXU on v6e/v7x; bias-add, SELU and accumulation stay in f32.

    Returns [B, outputNum] in x's original dtype.
    """
    out_dtype = x.dtype
    B, in_num = x.shape
    hid_num = w1_t.shape[1]
    out_num = w2_t.shape[1]
    b1 = b1.reshape(1, hid_num)

    if compute_dtype is not None:
        x = x.astype(compute_dtype)
        w1_t = w1_t.astype(compute_dtype)
        w2_t = w2_t.astype(compute_dtype)

    # Pad lane / contraction dims to 128 and the batch to the tile size.
    # Zero-padding keeps the math exact: padded x columns / w1 rows contribute
    # 0, padded hidden columns have zero bias (SELU(0)=0) and zero w2 rows, and
    # padded output columns of w2 are zero so the slice-back is exact.
    in_p = _round_up(in_num, _LANE)
    hid_p = _round_up(hid_num, _LANE)
    out_p = _round_up(out_num, _LANE)          # lane-dense output slab
    tile_b = max(_SUBLANE, min(tile_b, _round_up(B, _SUBLANE)))
    b_p = _round_up(B, tile_b)

    x_p = jnp.pad(x, ((0, b_p - B), (0, in_p - in_num)))
    w1_p = jnp.pad(w1_t, ((0, in_p - in_num), (0, hid_p - hid_num)))
    b1_p = jnp.pad(b1.astype(jnp.float32), ((0, 0), (0, hid_p - hid_num)))
    w2_p = jnp.pad(w2_t, ((0, hid_p - hid_num), (0, out_p - out_num)))

    grid = (b_p // tile_b,)

    out_padded = pl.pallas_call(
        classifier_kernel,
        out_shape=jax.ShapeDtypeStruct((b_p, out_p), out_dtype),
        grid_spec=pl.GridSpec(
            grid=grid,
            in_specs=[
                # x tiles stream along the batch axis (double-buffered DMA).
                pl.BlockSpec((tile_b, in_p), lambda i: (i, 0)),
                # Weights / bias: constant block index -> stay VMEM-resident.
                pl.BlockSpec((in_p, hid_p), lambda i: (0, 0)),
                pl.BlockSpec((1, hid_p), lambda i: (0, 0)),
                pl.BlockSpec((hid_p, out_p), lambda i: (0, 0)),
            ],
            out_specs=pl.BlockSpec((tile_b, out_p), lambda i: (i, 0)),
        ),
        compiler_params=pltpu.CompilerParams(
            # Batch tiles are independent -> megacore sharding on v7x.
            dimension_semantics=("parallel",)),
    )(x_p, w1_p, b1_p, w2_p)

    return out_padded[:B, :out_num]


def reference_forward(x, w1_t, b1, w2_t):
    h = x @ w1_t + b1.reshape(1, -1)
    h = SELU_SCALE * jnp.where(h > 0, h, SELU_ALPHA * jnp.expm1(h))
    return h @ w2_t


if __name__ == "__main__":
    # Small shapes consistent with the module's forward (2-D Linear input).
    batch, input_num, hidden_num, output_num = 8, 32, 64, 16

    key = jax.random.PRNGKey(0)
    kx, kw1, kb1, kw2 = jax.random.split(key, 4)

    x = jax.random.normal(kx, (batch, input_num), dtype=jnp.float32)
    # PyTorch Linear stores W as [out, in]; kernel uses the [in, out] layout.
    w1_t = jax.random.normal(kw1, (input_num, hidden_num), dtype=jnp.float32) * 0.1
    b1 = jax.random.normal(kb1, (hidden_num,), dtype=jnp.float32) * 0.1
    w2_t = jax.random.normal(kw2, (hidden_num, output_num), dtype=jnp.float32) * 0.1

    ref = reference_forward(x, w1_t, b1, w2_t)

    # f32 path (toy shape -> grid collapses to a single batch tile).
    out = jax.block_until_ready(classifier_forward(x, w1_t, b1, w2_t))
    assert out.shape == (batch, output_num)
    assert jnp.allclose(out, ref, atol=1e-5, rtol=1e-5), "f32 mismatch vs reference"

    # Non-tile-aligned larger batch: exercises batch tiling + pad / slice-back.
    xb = jax.random.normal(kx, (300, input_num), dtype=jnp.float32)
    refb = reference_forward(xb, w1_t, b1, w2_t)
    outb = jax.block_until_ready(
        classifier_forward(xb, w1_t, b1, w2_t, tile_b=128))
    assert outb.shape == (300, output_num)
    assert jnp.allclose(outb, refb, atol=1e-5, rtol=1e-5), "tiled-batch mismatch"

    # bf16 operands / f32 accumulation path (v6e / v7x MXU optimization).
    out_bf16 = jax.block_until_ready(
        classifier_forward(x, w1_t, b1, w2_t, compute_dtype=jnp.bfloat16))
    assert out_bf16.shape == (batch, output_num)
    assert jnp.allclose(out_bf16, ref, atol=5e-2, rtol=5e-2), "bf16 mismatch"

    print("KERNEL_OK")
</pallas_src>

<mosaic_0001>
module attributes {stable_mosaic.version = 11 : i64} {
  func.func @classifier_kernel(%arg0: i32, %arg1: memref<8x128xf32, #tpu.memory_space<vmem>>, %arg2: memref<128x128xf32, #tpu.memory_space<vmem>>, %arg3: memref<1x128xf32, #tpu.memory_space<vmem>>, %arg4: memref<128x128xf32, #tpu.memory_space<vmem>>, %arg5: memref<8x128xf32, #tpu.memory_space<vmem>>) attributes {dimension_semantics = [#tpu.dimension_semantics<parallel>], iteration_bounds = array<i64: 1>, scalar_prefetch = 0 : i64, scratch_operands = 0 : i64, tpu.core_type = #tpu.core_type<tc>, window_params = [{transform_indices = @transform_0, window_bounds = array<i64: 8, 128>}, {pipeline_mode = #tpu.pipeline_mode<synchronous>, transform_indices = @transform_1, window_bounds = array<i64: 128, 128>}, {pipeline_mode = #tpu.pipeline_mode<synchronous>, transform_indices = @transform_2, window_bounds = array<i64: 1, 128>}, {pipeline_mode = #tpu.pipeline_mode<synchronous>, transform_indices = @transform_3, window_bounds = array<i64: 128, 128>}, {transform_indices = @transform_4, window_bounds = array<i64: 8, 128>}]} {
    %c0 = arith.constant 0 : index
    %c0_0 = arith.constant 0 : index
    %0 = vector.load %arg1[%c0, %c0_0] : memref<8x128xf32, #tpu.memory_space<vmem>>, vector<8x128xf32>
    %c0_1 = arith.constant 0 : index
    %c0_2 = arith.constant 0 : index
    %1 = vector.load %arg2[%c0_1, %c0_2] : memref<128x128xf32, #tpu.memory_space<vmem>>, vector<128x128xf32>
    %cst = arith.constant dense<0.000000e+00> : vector<8x128xf32>
    %2 = tpu.matmul %0, %1, %cst {dimension_numbers = #tpu.dot_dimension_numbers<[1], [0], [0], [1], [0, 0, 1, 1], [], []>} : vector<8x128xf32>, vector<128x128xf32>, vector<8x128xf32> -> vector<8x128xf32>
    %c0_3 = arith.constant 0 : index
    %c0_4 = arith.constant 0 : index
    %3 = vector.load %arg3[%c0_3, %c0_4] : memref<1x128xf32, #tpu.memory_space<vmem>>, vector<1x128xf32>
    %4 = vector.broadcast %3 : vector<1x128xf32> to vector<8x128xf32>
    %5 = arith.addf %2, %4 : vector<8x128xf32>
    %cst_5 = arith.constant 0.000000e+00 : f32
    %6 = vector.broadcast %cst_5 : f32 to vector<8x128xf32>
    %7 = arith.cmpf ogt, %5, %6 : vector<8x128xf32>
    %8 = math.exp %5 : vector<8x128xf32>
    %cst_6 = arith.constant 1.000000e+00 : f32
    %9 = vector.broadcast %cst_6 : f32 to vector<8x128xf32>
    %10 = arith.subf %8, %9 : vector<8x128xf32>
    %cst_7 = arith.constant 1.67326319 : f32
    %11 = vector.broadcast %cst_7 : f32 to vector<8x128xf32>
    %12 = arith.mulf %11, %10 : vector<8x128xf32>
    %13 = arith.select %7, %5, %12 : vector<8x128xi1>, vector<8x128xf32>
    %cst_8 = arith.constant 1.05070102 : f32
    %14 = vector.broadcast %cst_8 : f32 to vector<8x128xf32>
    %15 = arith.mulf %14, %13 : vector<8x128xf32>
    %c0_9 = arith.constant 0 : index
    %c0_10 = arith.constant 0 : index
    %16 = vector.load %arg4[%c0_9, %c0_10] : memref<128x128xf32, #tpu.memory_space<vmem>>, vector<128x128xf32>
    %cst_11 = arith.constant dense<0.000000e+00> : vector<8x128xf32>
    %17 = tpu.matmul %15, %16, %cst_11 {dimension_numbers = #tpu.dot_dimension_numbers<[1], [0], [0], [1], [0, 0, 1, 1], [], []>} : vector<8x128xf32>, vector<128x128xf32>, vector<8x128xf32> -> vector<8x128xf32>
    %c0_12 = arith.constant 0 : index
    %c0_13 = arith.constant 0 : index
    %18 = vector.load %arg5[%c0_12, %c0_13] : memref<8x128xf32, #tpu.memory_space<vmem>>, vector<8x128xf32>
    tpu.vector_store %arg5[%c0_12, %c0_13], %17 {strides = array<i32>} : memref<8x128xf32, #tpu.memory_space<vmem>>, vector<8x128xf32>,
    return
  }
  func.func @transform_0(%arg0: i32) -> (i32, i32) {
    %c0_i32 = arith.constant 0 : i32
    %c0_i32_0 = arith.constant 0 : i32
    return %arg0, %c0_i32 : i32, i32
  }
  func.func @transform_1(%arg0: i32) -> (i32, i32) {
    %c0_i32 = arith.constant 0 : i32
    %c0_i32_0 = arith.constant 0 : i32
    %c0_i32_1 = arith.constant 0 : i32
    return %c0_i32, %c0_i32_0 : i32, i32
  }
  func.func @transform_2(%arg0: i32) -> (i32, i32) {
    %c0_i32 = arith.constant 0 : i32
    %c0_i32_0 = arith.constant 0 : i32
    %c0_i32_1 = arith.constant 0 : i32
    return %c0_i32, %c0_i32_0 : i32, i32
  }
  func.func @transform_3(%arg0: i32) -> (i32, i32) {
    %c0_i32 = arith.constant 0 : i32
    %c0_i32_0 = arith.constant 0 : i32
    %c0_i32_1 = arith.constant 0 : i32
    return %c0_i32, %c0_i32_0 : i32, i32
  }
  func.func @transform_4(%arg0: i32) -> (i32, i32) {
    %c0_i32 = arith.constant 0 : i32
    %c0_i32_0 = arith.constant 0 : i32
    return %arg0, %c0_i32 : i32, i32
  }
}

</mosaic_0001>

<llo_original>
// kernel: tpu_custom_call.1
$region0: #{tpu_custom_call.1}
  #allocation0 [shape = 'u32[]', space=smem, size = 0x4, offset = 0x4, fixed_abs, tag = 'smem constant byte address 0x4 - core index']
  #allocation1 [shape = 'u32[144,128]{1,0:T(1,128)}', space=vmem, size = 0x12000, scoped, tag = 'internal scratch']
  %s0 = inlined_call_operand.hbm [shape: f32[8,128], index: 0, kind: input, shape index: {}]
  %s1 = inlined_call_operand.hbm [shape: f32[128,128], index: 1, kind: input, shape index: {}]
  %s2 = inlined_call_operand.vmem [shape: f32[1,128], index: 2, kind: input, shape index: {}]
  %s3 = inlined_call_operand.hbm [shape: f32[128,128], index: 3, kind: input, shape index: {}]
  %s4 = inlined_call_operand.hbm [shape: f32[8,128], index: 4, kind: output, shape index: {}]
  %s5 = sld [smem:[#allocation0]]
  $region38: #{tpu_custom_call.1} parent=0
    _
  %s7 = ssub.s32 1, %s5
  %s8 = scalar_select 0, %s7, %s5
  $region1: #{tpu_custom_call.1} parent=0
    #allocation2 [shape = 'u8[4096]{0}', space=vmem, size = 0x1000, scoped, tag = 'input window, operand 0, single buffered']
    #allocation3 [shape = 's32[1]{0}', space=sflag, size = 0x4, scoped, tag = 'scoped memory for tpu_custom_call.1']
    #allocation4 [shape = 's32[1]{0}', space=sflag, size = 0x4, scoped, tag = 'scoped memory for tpu_custom_call.1']
    #allocation5 [shape = 'u8[65536]{0}', space=vmem, size = 0x10000, scoped, tag = 'input window, operand 1, single buffered']
    #allocation6 [shape = 's32[1]{0}', space=sflag, size = 0x4, scoped, tag = 'scoped memory for tpu_custom_call.1']
    #allocation7 [shape = 'u8[65536]{0}', space=vmem, size = 0x10000, scoped, tag = 'input window, operand 3, single buffered']
    #allocation8 [shape = 'u8[4096]{0}', space=vmem, size = 0x1000, scoped, tag = 'output window, operand 0, single buffered']
    %9 = vsyncpa [#allocation3], 0
    %10 = vsyncpa [#allocation6], 0
    %11 = vsyncpa [#allocation4], 0
    // Predicated region
    $region2: #{tpu_custom_call.1} parent=1 // pred_check
      _
    $region3: #{tpu_custom_call.1} parent=1 // pred_check_branch
      %13 = sbr.rel (0) target = $region5
    $region4: #{tpu_custom_call.1} parent=1 // pred_region
      %s15 = ssub.s32 128, 128
      %16 = vsyncadd [#allocation3], %s15
      %s18 = sshll.u32 [#allocation2], 4
      %s19 = int_to_ptr.vmem [resolvable:$true] %s18
      %21 = dma.hbm_to_vmem [thread:$0]  %s0, 128, %s19, [#allocation3]
    $region5: #{tpu_custom_call.1} parent=1 // pred_fallthru
      _
    // Predicated region
    $region6: #{tpu_custom_call.1} parent=1 // pred_check
      _
    $region7: #{tpu_custom_call.1} parent=1 // pred_check_branch
      %23 = sbr.rel (0) target = $region9
    $region8: #{tpu_custom_call.1} parent=1 // pred_region
      %s25 = ssub.s32 2048, 2048
      %26 = vsyncadd [#allocation6], %s25
      %s27 = sshll.u32 [#allocation5], 4
      %s28 = int_to_ptr.vmem [resolvable:$true] %s27
      %33 = dma.hbm_to_vmem [thread:$0]  %s1, 2048, %s28, [#allocation6], 128, 128, 8
    $region9: #{tpu_custom_call.1} parent=1 // pred_fallthru
      _
    // Predicated region
    $region10: #{tpu_custom_call.1} parent=1 // pred_check
      _
    $region11: #{tpu_custom_call.1} parent=1 // pred_check_branch
      %35 = sbr.rel (0) target = $region13
    $region12: #{tpu_custom_call.1} parent=1 // pred_region
      _
    $region13: #{tpu_custom_call.1} parent=1 // pred_fallthru
      _
    // Predicated region
    $region14: #{tpu_custom_call.1} parent=1 // pred_check
      _
    $region15: #{tpu_custom_call.1} parent=1 // pred_check_branch
      %37 = sbr.rel (0) target = $region17
    $region16: #{tpu_custom_call.1} parent=1 // pred_region
      %s39 = ssub.s32 2048, 2048
      %40 = vsyncadd [#allocation6], %s39
      %s41 = sshll.u32 [#allocation7], 4
      %s42 = int_to_ptr.vmem [resolvable:$true] %s41
      %47 = dma.hbm_to_vmem [thread:$0]  %s3, 2048, %s42, [#allocation6], 128, 128, 8
    $region17: #{tpu_custom_call.1} parent=1 // pred_fallthru
      _
    // Predicated region
    $region18: #{tpu_custom_call.1} parent=1 // pred_check
      _
    $region19: #{tpu_custom_call.1} parent=1 // pred_check_branch
      %49 = sbr.rel (0) target = $region21
    $region20: #{tpu_custom_call.1} parent=1 // pred_region
      %50 = dma.done [#allocation3], 128
    $region21: #{tpu_custom_call.1} parent=1 // pred_fallthru
      _
    // Predicated region
    $region22: #{tpu_custom_call.1} parent=1 // pred_check
      _
    $region23: #{tpu_custom_call.1} parent=1 // pred_check_branch
      %52 = sbr.rel (0) target = $region25
    $region24: #{tpu_custom_call.1} parent=1 // pred_region
      %53 = dma.done [#allocation6], 2048
    $region25: #{tpu_custom_call.1} parent=1 // pred_fallthru
      _
    // Predicated region
    $region26: #{tpu_custom_call.1} parent=1 // pred_check
      _
    $region27: #{tpu_custom_call.1} parent=1 // pred_check_branch
      %55 = sbr.rel (0) target = $region29
    $region28: #{tpu_custom_call.1} parent=1 // pred_region
      %56 = dma.done [#allocation6], 2048
    $region29: #{tpu_custom_call.1} parent=1 // pred_fallthru
      _
    %v57 = vld [vmem:[#allocation2] sm:$0xff]
    %v58 = vld [vmem:[#allocation5] sm:$0xff]
    %v59 = vld [vmem:[#allocation5 + $0x8] sm:$0xff]
    %v60 = vld [vmem:[#allocation5 + $0x10] sm:$0xff]
    %v61 = vld [vmem:[#allocation5 + $0x18] sm:$0xff]
    %v62 = vld [vmem:[#allocation5 + $0x20] sm:$0xff]
    %v63 = vld [vmem:[#allocation5 + $0x28] sm:$0xff]
    %v64 = vld [vmem:[#allocation5 + $0x30] sm:$0xff]
    %v65 = vld [vmem:[#allocation5 + $0x38] sm:$0xff]
    %v66 = vld [vmem:[#allocation5 + $0x40] sm:$0xff]
    %v67 = vld [vmem:[#allocation5 + $0x48] sm:$0xff]
    %v68 = vld [vmem:[#allocation5 + $0x50] sm:$0xff]
    %v69 = vld [vmem:[#allocation5 + $0x58] sm:$0xff]
    %v70 = vld [vmem:[#allocation5 + $0x60] sm:$0xff]
    %v71 = vld [vmem:[#allocation5 + $0x68] sm:$0xff]
    %v72 = vld [vmem:[#allocation5 + $0x70] sm:$0xff]
    %v73 = vld [vmem:[#allocation5 + $0x78] sm:$0xff]
    %v74 = vld [vmem:[%s2] sm:$0x1]
    %v76 = vlaneseq
    %v77 = vshrl.u32 %v76, 7
    %v78 = vsub.s32 0, %v77
    %v79 = vrot.slane %v74, %v78
    %81 = vmatprep.subr.mxu0 0.0
    %82 = vmatpush1.msra.mxu0 %v58
    %83 = vmatprep.subr.mxu0 0.0
    %84 = vmatpush1.msra.mxu0 %v59
    %85 = vmatprep.subr.mxu0 0.0
    %86 = vmatpush1.msra.mxu0 %v60
    %87 = vmatprep.subr.mxu0 0.0
    %88 = vmatpush1.msra.mxu0 %v61
    %89 = vmatprep.subr.mxu0 0.0
    %90 = vmatpush1.msra.mxu0 %v62
    %91 = vmatprep.subr.mxu0 0.0
    %92 = vmatpush1.msra.mxu0 %v63
    %93 = vmatprep.subr.mxu0 0.0
    %94 = vmatpush1.msra.mxu0 %v64
    %95 = vmatprep.subr.mxu0 0.0
    %96 = vmatpush1.msra.mxu0 %v65
    %97 = vmatprep.subr.mxu0 0.0
    %98 = vmatpush1.msra.mxu0 %v66
    %99 = vmatprep.subr.mxu0 0.0
    %100 = vmatpush1.msra.mxu0 %v67
    %101 = vmatprep.subr.mxu0 0.0
    %102 = vmatpush1.msra.mxu0 %v68
    %103 = vmatprep.subr.mxu0 0.0
    %104 = vmatpush1.msra.mxu0 %v69
    %105 = vmatprep.subr.mxu0 0.0
    %106 = vmatpush1.msra.mxu0 %v70
    %107 = vmatprep.subr.mxu0 0.0
    %108 = vmatpush1.msra.mxu0 %v71
    %109 = vmatprep.subr.mxu0 0.0
    %110 = vmatpush1.msra.mxu0 %v72
    %111 = vmatprep.subr.mxu0 0.0
    %112 = vmatpush1.msra.mxu0 %v73
    %113 = vmatprep.subr.mxu0 0.0
    %114 = vmatpush1.msra.mxu0 0.0
    %115 = vmatprep.subr.mxu0 0.0
    %116 = vmatpush1.msra.mxu0 0.0
    %117 = vmatprep.subr.mxu0 0.0
    %118 = vmatpush1.msra.mxu0 0.0
    %119 = vmatprep.subr.mxu0 0.0
    %120 = vmatpush1.msra.mxu0 0.0
    %121 = vmatprep.subr.mxu0 0.0
    %122 = vmatpush1.msra.mxu0 0.0
    %123 = vmatprep.subr.mxu0 0.0
    %124 = vmatpush1.msra.mxu0 0.0
    %125 = vmatprep.subr.mxu0 0.0
    %126 = vmatpush1.msra.mxu0 0.0
    %127 = vmatprep.subr.mxu0 0.0
    %128 = vmatpush1.msra.mxu0 0.0
    %129 = vmatprep.subr.mxu0 0.0
    %130 = vmatpush1.msra.mxu0 0.0
    %131 = vmatprep.subr.mxu0 0.0
    %132 = vmatpush1.msra.mxu0 0.0
    %133 = vmatprep.subr.mxu0 0.0
    %134 = vmatpush1.msra.mxu0 0.0
    %135 = vmatprep.subr.mxu0 0.0
    %136 = vmatpush1.msra.mxu0 0.0
    %137 = vmatprep.subr.mxu0 0.0
    %138 = vmatpush1.msra.mxu0 0.0
    %139 = vmatprep.subr.mxu0 0.0
    %140 = vmatpush1.msra.mxu0 0.0
    %141 = vmatprep.subr.mxu0 0.0
    %142 = vmatpush1.msra.mxu0 0.0
    %143 = vmatprep.subr.mxu0 0.0
    %144 = vmatpush1.msra.mxu0 0.0
    %145 = vmatprep.mubr.f32.mxu0 0.0
    %146 = vmatmul.mubr.f32.gmra.mrb[0].mxu0 %v57
    %v147 = vpop.f32.mrb[0].mxu0
    %v148 = vadd.f32 %v79, %v147
    %v149 = vpop.f32.mrb[0].mxu0
    %150 = vdwg.mxu0
    %vm151 = vcmp.gt.f32.partialorder %v148, 0.0
    %v152 = vmul.f32 %v148, 1.442695
    %v153 = vpow.pop %v152
    %v154 = vsub.f32 %v153, 1.0
    %v155 = vmul.f32 %v154, 1.6732632
    %v156 = vsel %vm151, %v148, %v155
    %v157 = vmul.f32 %v156, 1.050701
    %v158 = vld [vmem:[#allocation7] sm:$0xff]
    %v159 = vld [vmem:[#allocation7 + $0x8] sm:$0xff]
    %v160 = vld [vmem:[#allocation7 + $0x10] sm:$0xff]
    %v161 = vld [vmem:[#allocation7 + $0x18] sm:$0xff]
    %v162 = vld [vmem:[#allocation7 + $0x20] sm:$0xff]
    %v163 = vld [vmem:[#allocation7 + $0x28] sm:$0xff]
    %v164 = vld [vmem:[#allocation7 + $0x30] sm:$0xff]
    %v165 = vld [vmem:[#allocation7 + $0x38] sm:$0xff]
    %v166 = vld [vmem:[#allocation7 + $0x40] sm:$0xff]
    %v167 = vld [vmem:[#allocation7 + $0x48] sm:$0xff]
    %v168 = vld [vmem:[#allocation7 + $0x50] sm:$0xff]
    %v169 = vld [vmem:[#allocation7 + $0x58] sm:$0xff]
    %v170 = vld [vmem:[#allocation7 + $0x60] sm:$0xff]
    %v171 = vld [vmem:[#allocation7 + $0x68] sm:$0xff]
    %v172 = vld [vmem:[#allocation7 + $0x70] sm:$0xff]
    %v173 = vld [vmem:[#allocation7 + $0x78] sm:$0xff]
    %174 = vmatprep.subr.mxu0 0.0
    %175 = vmatpush1.msra.mxu0 %v158
    %176 = vmatprep.subr.mxu0 0.0
    %177 = vmatpush1.msra.mxu0 %v159
    %178 = vmatprep.subr.mxu0 0.0
    %179 = vmatpush1.msra.mxu0 %v160
    %180 = vmatprep.subr.mxu0 0.0
    %181 = vmatpush1.msra.mxu0 %v161
    %182 = vmatprep.subr.mxu0 0.0
    %183 = vmatpush1.msra.mxu0 %v162
    %184 = vmatprep.subr.mxu0 0.0
    %185 = vmatpush1.msra.mxu0 %v163
    %186 = vmatprep.subr.mxu0 0.0
    %187 = vmatpush1.msra.mxu0 %v164
    %188 = vmatprep.subr.mxu0 0.0
    %189 = vmatpush1.msra.mxu0 %v165
    %190 = vmatprep.subr.mxu0 0.0
    %191 = vmatpush1.msra.mxu0 %v166
    %192 = vmatprep.subr.mxu0 0.0
    %193 = vmatpush1.msra.mxu0 %v167
    %194 = vmatprep.subr.mxu0 0.0
    %195 = vmatpush1.msra.mxu0 %v168
    %196 = vmatprep.subr.mxu0 0.0
    %197 = vmatpush1.msra.mxu0 %v169
    %198 = vmatprep.subr.mxu0 0.0
    %199 = vmatpush1.msra.mxu0 %v170
    %200 = vmatprep.subr.mxu0 0.0
    %201 = vmatpush1.msra.mxu0 %v171
    %202 = vmatprep.subr.mxu0 0.0
    %203 = vmatpush1.msra.mxu0 %v172
    %204 = vmatprep.subr.mxu0 0.0
    %205 = vmatpush1.msra.mxu0 %v173
    %206 = vmatprep.subr.mxu0 0.0
    %207 = vmatpush1.msra.mxu0 0.0
    %208 = vmatprep.subr.mxu0 0.0
    %209 = vmatpush1.msra.mxu0 0.0
    %210 = vmatprep.subr.mxu0 0.0
    %211 = vmatpush1.msra.mxu0 0.0
    %212 = vmatprep.subr.mxu0 0.0
    %213 = vmatpush1.msra.mxu0 0.0
    %214 = vmatprep.subr.mxu0 0.0
    %215 = vmatpush1.msra.mxu0 0.0
    %216 = vmatprep.subr.mxu0 0.0
    %217 = vmatpush1.msra.mxu0 0.0
    %218 = vmatprep.subr.mxu0 0.0
    %219 = vmatpush1.msra.mxu0 0.0
    %220 = vmatprep.subr.mxu0 0.0
    %221 = vmatpush1.msra.mxu0 0.0
    %222 = vmatprep.subr.mxu0 0.0
    %223 = vmatpush1.msra.mxu0 0.0
    %224 = vmatprep.subr.mxu0 0.0
    %225 = vmatpush1.msra.mxu0 0.0
    %226 = vmatprep.subr.mxu0 0.0
    %227 = vmatpush1.msra.mxu0 0.0
    %228 = vmatprep.subr.mxu0 0.0
    %229 = vmatpush1.msra.mxu0 0.0
    %230 = vmatprep.subr.mxu0 0.0
    %231 = vmatpush1.msra.mxu0 0.0
    %232 = vmatprep.subr.mxu0 0.0
    %233 = vmatpush1.msra.mxu0 0.0
    %234 = vmatprep.subr.mxu0 0.0
    %235 = vmatpush1.msra.mxu0 0.0
    %236 = vmatprep.subr.mxu0 0.0
    %237 = vmatpush1.msra.mxu0 0.0
    %238 = vmatprep.mubr.f32.mxu0 0.0
    %239 = vmatmul.mubr.f32.gmra.mrb[0].mxu0 %v157
    %v240 = vpop.f32.mrb[0].mxu0
    %v241 = vadd.f32 0.0, %v240
    %v242 = vpop.f32.mrb[0].mxu0
    %243 = vdwg.mxu0
    %244 = vst [vmem:[#allocation8] sm:$0xff] %v241
    // Predicated region
    $region30: #{tpu_custom_call.1} parent=1 // pred_check
      _
    $region31: #{tpu_custom_call.1} parent=1 // pred_check_branch
      %246 = sbr.rel (0) target = $region33
    $region32: #{tpu_custom_call.1} parent=1 // pred_region
      %s248 = ssub.s32 128, 128
      %249 = vsyncadd [#allocation4], %s248
      %s251 = sshll.u32 [#allocation8], 4
      %s252 = int_to_ptr.vmem [resolvable:$true] %s251
      %254 = dma.vmem_to_hbm [thread:$0]  %s252, 128, %s4, [#allocation4]
    $region33: #{tpu_custom_call.1} parent=1 // pred_fallthru
      _
    // Predicated region
    $region34: #{tpu_custom_call.1} parent=1 // pred_check
      _
    $region35: #{tpu_custom_call.1} parent=1 // pred_check_branch
      %256 = sbr.rel (0) target = $region37
    $region36: #{tpu_custom_call.1} parent=1 // pred_region
      %257 = dma.done [#allocation4], 128
    $region37: #{tpu_custom_call.1} parent=1 // pred_fallthru
      _
    %258 = vsyncpa [#allocation3], 1
    %259 = vsyncpa [#allocation6], 1
    %260 = vsyncpa [#allocation4], 1

</llo_original>
